<compile_context>
chip_gen: v7x
topology: tpu7x:2x2x1
jax: 0.10.0
libtpu: 0.0.40
codegen_flags: <defaults>
</compile_context>

<pallas_src>
import jax
import jax.numpy as jnp
from jax.experimental import pallas as pl
from jax.experimental.pallas import tpu as pltpu


def rope_gen(dim, seq_len, dtype):
    """JAX port of the PyTorch rope_gen (glue, runs outside the kernel)."""
    inv_freq = 1.0 / (10000.0 ** (jnp.arange(0, dim, 2, dtype=jnp.float32) / dim))
    t = jnp.arange(seq_len, dtype=jnp.float32)
    freqs = jnp.einsum("i,j->ij", t, inv_freq)          # (S, D/2)
    emb = jnp.concatenate((freqs, freqs), axis=-1)      # (S, D)
    return jnp.cos(emb).astype(dtype), jnp.sin(emb).astype(dtype)


def _fold_sign_tables(cos, sin):
    """Fold rotate_half's sign and the k-path scale=-1 into the tables.

    rotate_half(x) == roll(x, D/2, -1) * sign,  sign = (-1 first half, +1 second)
      q path (scale=+1): qo = q*cos     + roll(q)*(sign*sin)
      k path (scale=-1): ko = k*(-cos)  + roll(k)*(-sign*sin)
    Sign flips are exact in FP, so this is bitwise-equivalent to the reference.
    """
    S, D = cos.shape
    half = D // 2
    sign = jnp.concatenate(
        [-jnp.ones((half,), cos.dtype), jnp.ones((D - half,), cos.dtype)]
    )
    sin_q = sin * sign
    cos_k = -cos
    sin_k = -sin_q
    return cos, sin_q, cos_k, sin_k


def rope_kernel(cos_q_ref, sin_q_ref, cos_k_ref, sin_k_ref, q_ref, k_ref,
                qo_ref, ko_ref):
    # Block shapes: tables -> (TS, D); q/k/qo/ko -> (1, TS, H, D)
    d = q_ref.shape[-1]
    cos_q = cos_q_ref[...][None, :, None, :]   # (1, TS, 1, D), broadcasts over H
    sin_q = sin_q_ref[...][None, :, None, :]
    cos_k = cos_k_ref[...][None, :, None, :]
    sin_k = sin_k_ref[...][None, :, None, :]

    q = q_ref[...]
    k = k_ref[...]
    q_rot = pltpu.roll(q, shift=d // 2, axis=3)   # XLU lane rotation, off VALU
    k_rot = pltpu.roll(k, shift=d // 2, axis=3)

    qo_ref[...] = q * cos_q + q_rot * sin_q       # rope_apply(q, +1)
    ko_ref[...] = k * cos_k + k_rot * sin_k       # rope_apply(k, -1)


def _vmem_budget_and_limit():
    """Pick a per-step VMEM budget + scoped limit for the current TPU gen."""
    vmem = 64 << 20  # conservative default (v7x-sized)
    try:
        info = pltpu.get_tpu_info()
        vmem = int(getattr(info, "vmem_capacity_bytes", vmem))
    except Exception:
        pass
    if vmem >= (100 << 20):
        # v5e / v6e: 128 MiB physical VMEM -> big tiles, raise scoped limit.
        return 48 << 20, 96 << 20
    # v7x: 64 MiB physical per TensorCore -> smaller tiles, modest limit.
    return 20 << 20, 40 << 20


def _choose_seq_tile(S, H, D, qk_itemsize, tbl_itemsize, budget_bytes):
    """Largest S-tile that (a) divides S, (b) satisfies the (8,128) rule for
    the (TS, D) table blocks, and (c) keeps the double-buffered footprint of
    q,k,qo,ko (4 slabs) + 4 tables under the VMEM budget."""
    per_row = 8 * H * D * qk_itemsize + 8 * D * tbl_itemsize
    candidates = [t for t in range(1, S + 1)
                  if S % t == 0 and (t % 8 == 0 or t == S)]
    fitting = [t for t in candidates if t * per_row <= budget_bytes]
    return max(fitting) if fitting else min(candidates)


def rotary_embedding_forward(q, k, seq_len):
    """Pallas equivalent of RotaryEmbedding.forward(q, k, seq_len) (4-D path)."""
    B, S, H, D = q.shape
    assert k.shape == q.shape
    assert S == seq_len, "kernel assumes seq axis == seq_len (4-D path)"
    assert D % 2 == 0
    # TODO(synk): 3-D (B*S, H, D) input path of the PyTorch module not implemented.

    cos, sin = rope_gen(D, seq_len, k.dtype)                 # (S, D) each
    cos_q, sin_q, cos_k, sin_k = _fold_sign_tables(cos, sin)  # (S, D) each

    qk_itemsize = jnp.dtype(q.dtype).itemsize
    tbl_itemsize = jnp.dtype(cos.dtype).itemsize
    budget, vmem_limit = _vmem_budget_and_limit()
    TS = _choose_seq_tile(S, H, D, qk_itemsize, tbl_itemsize, budget)

    grid = (B, S // TS)
    qk_spec = pl.BlockSpec((1, TS, H, D), lambda b, s: (b, s, 0, 0))
    tbl_spec = pl.BlockSpec((TS, D), lambda b, s: (s, 0))

    cost = pl.CostEstimate(
        flops=6 * B * S * H * D,
        transcendentals=0,
        bytes_accessed=4 * B * S * H * D * qk_itemsize + 4 * S * D * tbl_itemsize,
    )

    q_out, k_out = pl.pallas_call(
        rope_kernel,
        out_shape=(
            jax.ShapeDtypeStruct(q.shape, q.dtype),
            jax.ShapeDtypeStruct(k.shape, k.dtype),
        ),
        grid=grid,
        in_specs=[tbl_spec, tbl_spec, tbl_spec, tbl_spec, qk_spec, qk_spec],
        out_specs=(qk_spec, qk_spec),
        # RoPE is safe in place: q_out aliases q, k_out aliases k.
        input_output_aliases={4: 0, 5: 1},
        cost_estimate=cost,
        compiler_params=pltpu.CompilerParams(
            dimension_semantics=("parallel", "parallel"),
            vmem_limit_bytes=vmem_limit,
        ),
    )(cos_q, sin_q, cos_k, sin_k, q, k)
    return q_out, k_out


def _reference(q, k, seq_len):
    """Pure-JAX reference mirroring the PyTorch module exactly."""
    B, S, H, D = q.shape
    cos, sin = rope_gen(D, seq_len, k.dtype)
    cos = cos[None, :, None, :]
    sin = sin[None, :, None, :]

    def rot_half(x):
        x1, x2 = jnp.split(x, 2, axis=-1)
        return jnp.concatenate((-x2, x1), axis=-1)

    def rope_apply(x, scale):
        return x * cos * scale + rot_half(x) * sin * scale

    return rope_apply(q, 1.0), rope_apply(k, -1.0)


if __name__ == "__main__":
    B, S, H, D = 2, 8, 4, 128
    key = jax.random.PRNGKey(0)
    kq, kk = jax.random.split(key)
    q = jax.random.normal(kq, (B, S, H, D), dtype=jnp.float32)
    k = jax.random.normal(kk, (B, S, H, D), dtype=jnp.float32)

    # Compute the reference before the kernel call (kernel declares that its
    # outputs may alias the q/k buffers).
    q_ref, k_ref = _reference(q, k, seq_len=S)
    jax.block_until_ready((q_ref, k_ref))

    q_out, k_out = rotary_embedding_forward(q, k, seq_len=S)
    jax.block_until_ready((q_out, k_out))

    assert jnp.allclose(q_out, q_ref, atol=1e-5, rtol=1e-5)
    assert jnp.allclose(k_out, k_ref, atol=1e-5, rtol=1e-5)

    print("KERNEL_OK")
</pallas_src>

<mosaic_0001>
module attributes {stable_mosaic.version = 11 : i64} {
  func.func @rope_kernel(%arg0: i32, %arg1: i32, %arg2: memref<8x128xf32, #tpu.memory_space<vmem>>, %arg3: memref<8x128xf32, #tpu.memory_space<vmem>>, %arg4: memref<8x128xf32, #tpu.memory_space<vmem>>, %arg5: memref<8x128xf32, #tpu.memory_space<vmem>>, %arg6: memref<1x8x4x128xf32, #tpu.memory_space<vmem>>, %arg7: memref<1x8x4x128xf32, #tpu.memory_space<vmem>>, %arg8: memref<1x8x4x128xf32, #tpu.memory_space<vmem>>, %arg9: memref<1x8x4x128xf32, #tpu.memory_space<vmem>>) attributes {dimension_semantics = [#tpu.dimension_semantics<parallel>, #tpu.dimension_semantics<parallel>], iteration_bounds = array<i64: 2, 1>, scalar_prefetch = 0 : i64, scratch_operands = 0 : i64, tpu.core_type = #tpu.core_type<tc>, window_params = [{transform_indices = @transform_0, window_bounds = array<i64: 8, 128>}, {transform_indices = @transform_1, window_bounds = array<i64: 8, 128>}, {transform_indices = @transform_2, window_bounds = array<i64: 8, 128>}, {transform_indices = @transform_3, window_bounds = array<i64: 8, 128>}, {transform_indices = @transform_4, window_bounds = array<i64: 1, 8, 4, 128>}, {transform_indices = @transform_5, window_bounds = array<i64: 1, 8, 4, 128>}, {transform_indices = @transform_6, window_bounds = array<i64: 1, 8, 4, 128>}, {transform_indices = @transform_7, window_bounds = array<i64: 1, 8, 4, 128>}]} {
    %c0 = arith.constant 0 : index
    %c0_0 = arith.constant 0 : index
    %0 = vector.load %arg2[%c0, %c0_0] : memref<8x128xf32, #tpu.memory_space<vmem>>, vector<8x128xf32>
    %1 = vector.shape_cast %0 : vector<8x128xf32> to vector<1x8x1x128xf32>
    %c0_1 = arith.constant 0 : index
    %c0_2 = arith.constant 0 : index
    %2 = vector.load %arg3[%c0_1, %c0_2] : memref<8x128xf32, #tpu.memory_space<vmem>>, vector<8x128xf32>
    %3 = vector.shape_cast %2 : vector<8x128xf32> to vector<1x8x1x128xf32>
    %c0_3 = arith.constant 0 : index
    %c0_4 = arith.constant 0 : index
    %4 = vector.load %arg4[%c0_3, %c0_4] : memref<8x128xf32, #tpu.memory_space<vmem>>, vector<8x128xf32>
    %5 = vector.shape_cast %4 : vector<8x128xf32> to vector<1x8x1x128xf32>
    %c0_5 = arith.constant 0 : index
    %c0_6 = arith.constant 0 : index
    %6 = vector.load %arg5[%c0_5, %c0_6] : memref<8x128xf32, #tpu.memory_space<vmem>>, vector<8x128xf32>
    %7 = vector.shape_cast %6 : vector<8x128xf32> to vector<1x8x1x128xf32>
    %c0_7 = arith.constant 0 : index
    %c0_8 = arith.constant 0 : index
    %c0_9 = arith.constant 0 : index
    %c0_10 = arith.constant 0 : index
    %8 = vector.load %arg6[%c0_7, %c0_8, %c0_9, %c0_10] : memref<1x8x4x128xf32, #tpu.memory_space<vmem>>, vector<1x8x4x128xf32>
    %c0_11 = arith.constant 0 : index
    %c0_12 = arith.constant 0 : index
    %c0_13 = arith.constant 0 : index
    %c0_14 = arith.constant 0 : index
    %9 = vector.load %arg7[%c0_11, %c0_12, %c0_13, %c0_14] : memref<1x8x4x128xf32, #tpu.memory_space<vmem>>, vector<1x8x4x128xf32>
    %c64_i32 = arith.constant 64 : i32
    %10 = tpu.dynamic_rotate %8 by %c64_i32 dim 3 : vector<1x8x4x128xf32>, i32 -> vector<1x8x4x128xf32>
    %c64_i32_15 = arith.constant 64 : i32
    %11 = tpu.dynamic_rotate %9 by %c64_i32_15 dim 3 : vector<1x8x4x128xf32>, i32 -> vector<1x8x4x128xf32>
    %12 = vector.broadcast %1 : vector<1x8x1x128xf32> to vector<1x8x4x128xf32>
    %13 = arith.mulf %8, %12 : vector<1x8x4x128xf32>
    %14 = vector.broadcast %3 : vector<1x8x1x128xf32> to vector<1x8x4x128xf32>
    %15 = arith.mulf %10, %14 : vector<1x8x4x128xf32>
    %16 = arith.addf %13, %15 : vector<1x8x4x128xf32>
    %c0_16 = arith.constant 0 : index
    %c0_17 = arith.constant 0 : index
    %c0_18 = arith.constant 0 : index
    %c0_19 = arith.constant 0 : index
    %17 = vector.load %arg8[%c0_16, %c0_17, %c0_18, %c0_19] : memref<1x8x4x128xf32, #tpu.memory_space<vmem>>, vector<1x8x4x128xf32>
    tpu.vector_store %arg8[%c0_16, %c0_17, %c0_18, %c0_19], %16 {strides = array<i32>} : memref<1x8x4x128xf32, #tpu.memory_space<vmem>>, vector<1x8x4x128xf32>,
    %18 = vector.broadcast %5 : vector<1x8x1x128xf32> to vector<1x8x4x128xf32>
    %19 = arith.mulf %9, %18 : vector<1x8x4x128xf32>
    %20 = vector.broadcast %7 : vector<1x8x1x128xf32> to vector<1x8x4x128xf32>
    %21 = arith.mulf %11, %20 : vector<1x8x4x128xf32>
    %22 = arith.addf %19, %21 : vector<1x8x4x128xf32>
    %c0_20 = arith.constant 0 : index
    %c0_21 = arith.constant 0 : index
    %c0_22 = arith.constant 0 : index
    %c0_23 = arith.constant 0 : index
    %23 = vector.load %arg9[%c0_20, %c0_21, %c0_22, %c0_23] : memref<1x8x4x128xf32, #tpu.memory_space<vmem>>, vector<1x8x4x128xf32>
    tpu.vector_store %arg9[%c0_20, %c0_21, %c0_22, %c0_23], %22 {strides = array<i32>} : memref<1x8x4x128xf32, #tpu.memory_space<vmem>>, vector<1x8x4x128xf32>,
    return
  }
  func.func @transform_0(%arg0: i32, %arg1: i32) -> (i32, i32) {
    %c0_i32 = arith.constant 0 : i32
    %c0_i32_0 = arith.constant 0 : i32
    return %arg1, %c0_i32 : i32, i32
  }
  func.func @transform_1(%arg0: i32, %arg1: i32) -> (i32, i32) {
    %c0_i32 = arith.constant 0 : i32
    %c0_i32_0 = arith.constant 0 : i32
    return %arg1, %c0_i32 : i32, i32
  }
  func.func @transform_2(%arg0: i32, %arg1: i32) -> (i32, i32) {
    %c0_i32 = arith.constant 0 : i32
    %c0_i32_0 = arith.constant 0 : i32
    return %arg1, %c0_i32 : i32, i32
  }
  func.func @transform_3(%arg0: i32, %arg1: i32) -> (i32, i32) {
    %c0_i32 = arith.constant 0 : i32
    %c0_i32_0 = arith.constant 0 : i32
    return %arg1, %c0_i32 : i32, i32
  }
  func.func @transform_4(%arg0: i32, %arg1: i32) -> (i32, i32, i32, i32) {
    %c0_i32 = arith.constant 0 : i32
    %c0_i32_0 = arith.constant 0 : i32
    %c0_i32_1 = arith.constant 0 : i32
    return %arg0, %arg1, %c0_i32, %c0_i32_0 : i32, i32, i32, i32
  }
  func.func @transform_5(%arg0: i32, %arg1: i32) -> (i32, i32, i32, i32) {
    %c0_i32 = arith.constant 0 : i32
    %c0_i32_0 = arith.constant 0 : i32
    %c0_i32_1 = arith.constant 0 : i32
    return %arg0, %arg1, %c0_i32, %c0_i32_0 : i32, i32, i32, i32
  }
  func.func @transform_6(%arg0: i32, %arg1: i32) -> (i32, i32, i32, i32) {
    %c0_i32 = arith.constant 0 : i32
    %c0_i32_0 = arith.constant 0 : i32
    %c0_i32_1 = arith.constant 0 : i32
    return %arg0, %arg1, %c0_i32, %c0_i32_0 : i32, i32, i32, i32
  }
  func.func @transform_7(%arg0: i32, %arg1: i32) -> (i32, i32, i32, i32) {
    %c0_i32 = arith.constant 0 : i32
    %c0_i32_0 = arith.constant 0 : i32
    %c0_i32_1 = arith.constant 0 : i32
    return %arg0, %arg1, %c0_i32, %c0_i32_0 : i32, i32, i32, i32
  }
}

</mosaic_0001>

<llo_original>
// kernel: tpu_custom_call.1
$region0: #{tpu_custom_call.1}
  #allocation0 [shape = 'u32[]', space=smem, size = 0x4, offset = 0x4, fixed_abs, tag = 'smem constant byte address 0x4 - core index']
  #allocation1 [shape = 'u32[144,128]{1,0:T(1,128)}', space=vmem, size = 0x12000, scoped, tag = 'internal scratch']
  %s0 = inlined_call_operand.vmem [shape: f32[8,128], index: 0, kind: input, shape index: {}]
  %s1 = inlined_call_operand.vmem [shape: f32[8,128], index: 1, kind: input, shape index: {}]
  %s2 = inlined_call_operand.vmem [shape: f32[8,128], index: 2, kind: input, shape index: {}]
  %s3 = inlined_call_operand.vmem [shape: f32[8,128], index: 3, kind: input, shape index: {}]
  %s4 = inlined_call_operand.hbm [shape: f32[2,8,4,128], index: 4, kind: input, shape index: {}, may-alias: {4,6}]
  %s5 = inlined_call_operand.hbm [shape: f32[2,8,4,128], index: 5, kind: input, shape index: {}, may-alias: {5,7}]
  %s6 = inlined_call_operand.hbm [shape: f32[2,8,4,128], index: 6, kind: output, shape index: {0}, may-alias: {4,6}]
  %s7 = inlined_call_operand.hbm [shape: f32[2,8,4,128], index: 7, kind: output, shape index: {1}, may-alias: {5,7}]
  %8 = xla_tuple %s6, %s7
  %s9 = sld [smem:[#allocation0]]
  $region73: #{tpu_custom_call.1} parent=0
    _
  %s11 = ssub.s32 1, %s9
  %s12 = scalar_select 0, %s11, %s9
  $region1: #{tpu_custom_call.1} parent=0
    #allocation2 [shape = 'u8[32768]{0}', space=vmem, size = 0x8000, scoped, tag = 'input window, operand 4']
    #allocation3 [shape = 's32[2]{0}', space=sflag, size = 0x8, scoped, tag = 'scoped memory for tpu_custom_call.1']
    #allocation4 [shape = 's32[2]{0}', space=sflag, size = 0x8, scoped, tag = 'scoped memory for tpu_custom_call.1']
    #allocation5 [shape = 'u8[32768]{0}', space=vmem, size = 0x8000, scoped, tag = 'input window, operand 5']
    #allocation6 [shape = 's32[2]{0}', space=sflag, size = 0x8, scoped, tag = 'scoped memory for tpu_custom_call.1']
    #allocation7 [shape = 'u8[32768]{0}', space=vmem, size = 0x8000, scoped, tag = 'output window, operand 0']
    #allocation8 [shape = 'u8[32768]{0}', space=vmem, size = 0x8000, scoped, tag = 'output window, operand 1']
    #allocation9 [shape = 's32[2]{0}', space=sflag, size = 0x8, scoped, tag = 'scoped memory for tpu_custom_call.1']
    %13 = vsyncpa [#allocation3], 0
    %s14 = scalar_lea.sflag [#allocation3], 1
    %15 = vsyncpa %s14, 0
    %16 = vsyncpa [#allocation6], 0
    %s17 = scalar_lea.sflag [#allocation6], 1
    %18 = vsyncpa %s17, 0
    %19 = vsyncpa [#allocation4], 0
    %s20 = scalar_lea.sflag [#allocation4], 1
    %21 = vsyncpa %s20, 0
    %22 = vsyncpa [#allocation9], 0
    %s23 = scalar_lea.sflag [#allocation9], 1
    %24 = vsyncpa %s23, 0
    loop: start=0, step=1, limit=4
    $region2: #{tpu_custom_call.1} parent=1 // loop_pre_header
      _
    $region3: #{tpu_custom_call.1} parent=1 // loop_header
      %s26 = sphi 0, %s30
      %p27 = scmp.ge.s32.totalorder %s26, 4
      %s33 = sphi 0, %s45
      %s34 = sphi 0, %s41
      %s35 = sphi 0, %s33
      %s36 = sphi 0, %s34
      %s37 = sphi 0, %s35
      %s38 = sphi 0, %s36
      %s48 = sphi 0, %s50
      %s51 = sphi 0, %s48
      %s52 = sphi 0, %s51
      %s68 = sphi 0, %s52
      %s74 = sphi 0, %s76
      %s77 = sphi 0, %s74
      %s78 = sphi 0, %s77
      %s94 = sphi 0, %s78
      %s100 = sphi 0, %s102
      %s103 = sphi 0, %s100
      %s104 = sphi 0, %s103
      %s120 = sphi 0, %s104
      %s126 = sphi 0, %s128
      %s129 = sphi 0, %s126
      %s130 = sphi 0, %s129
      %s146 = sphi 0, %s130
      %s154 = sphi 0, %s156
      %s157 = sphi 0, %s154
      %s158 = sphi 0, %s157
      %s174 = sphi 0, %s158
      %s182 = sphi 0, %s184
      %s185 = sphi 0, %s182
      %s186 = sphi 0, %s185
      %s202 = sphi 0, %s186
      %s210 = sphi 0, %s212
      %s213 = sphi 0, %s210
      %s214 = sphi 0, %s213
      %s230 = sphi 0, %s214
      %s238 = sphi 0, %s240
      %s241 = sphi 0, %s238
      %s242 = sphi 0, %s241
      %s258 = sphi 0, %s242
    $region4: #{tpu_custom_call.1} parent=1 // loop_header_branch
      %29 = sbr.rel (%p27) target = $region8
    $region5: #{tpu_custom_call.1} parent=1 // loop_body
      %s31 = ssub.s32 %s26, 1
      %s32 = ssub.s32 %s26, 2
      %s39 = sadd.s32 1, %s34
      %p40 = scmp.ge.s32.totalorder %s39, 1
      %s41 = scalar_select %p40, 0, %s39
      %s42 = sadd.s32 1, %s33
      %s43 = scalar_select %p40, %s42, %s33
      %p44 = scmp.ge.s32.totalorder %s43, 2
      %s45 = scalar_select %p44, 0, %s43
      %s46 = ssub.s32 %s34, %s41
      %p47 = scmp.eq.s32.totalorder %s46, 0
      %s49 = sadd.s32 %s48, 1
      %s50 = scalar_select %p47, %s48, %s49
      %p53 = pneg %p47
      %p54 = scmp.eq.s32.totalorder %s26, 1
      %p55 = por %p53, %p54
      %p56 = scmp.ne.s32.totalorder %s48, %s51
      %p57 = scmp.eq.s32.totalorder %s26, 0
      %p58 = por %p56, %p57
      %p59 = scmp.ne.s32.totalorder %s48, %s51
      %p60 = scmp.eq.s32.totalorder %s31, 1
      %p61 = por %p59, %p60
      %p62 = scmp.ne.s32.totalorder %s51, %s52
      %p63 = scmp.eq.s32.totalorder %s31, 0
      %p64 = por %p62, %p63
      %p65 = scmp.ne.s32.totalorder %s51, %s52
      %p66 = scmp.eq.s32.totalorder %s32, 1
      %p67 = por %p65, %p66
      %p69 = scmp.ne.s32.totalorder %s52, %s68
      %p70 = scmp.eq.s32.totalorder %s32, 0
      %p71 = por %p69, %p70
      %s72 = ssub.s32 %s34, %s41
      %p73 = scmp.eq.s32.totalorder %s72, 0
      %s75 = sadd.s32 %s74, 1
      %s76 = scalar_select %p73, %s74, %s75
      %p79 = pneg %p73
      %p80 = scmp.eq.s32.totalorder %s26, 1
      %p81 = por %p79, %p80
      %p82 = scmp.ne.s32.totalorder %s74, %s77
      %p83 = scmp.eq.s32.totalorder %s26, 0
      %p84 = por %p82, %p83
      %p85 = scmp.ne.s32.totalorder %s74, %s77
      %p86 = scmp.eq.s32.totalorder %s31, 1
      %p87 = por %p85, %p86
      %p88 = scmp.ne.s32.totalorder %s77, %s78
      %p89 = scmp.eq.s32.totalorder %s31, 0
      %p90 = por %p88, %p89
      %p91 = scmp.ne.s32.totalorder %s77, %s78
      %p92 = scmp.eq.s32.totalorder %s32, 1
      %p93 = por %p91, %p92
      %p95 = scmp.ne.s32.totalorder %s78, %s94
      %p96 = scmp.eq.s32.totalorder %s32, 0
      %p97 = por %p95, %p96
      %s98 = ssub.s32 %s34, %s41
      %p99 = scmp.eq.s32.totalorder %s98, 0
      %s101 = sadd.s32 %s100, 1
      %s102 = scalar_select %p99, %s100, %s101
      %p105 = pneg %p99
      %p106 = scmp.eq.s32.totalorder %s26, 1
      %p107 = por %p105, %p106
      %p108 = scmp.ne.s32.totalorder %s100, %s103
      %p109 = scmp.eq.s32.totalorder %s26, 0
      %p110 = por %p108, %p109
      %p111 = scmp.ne.s32.totalorder %s100, %s103
      %p112 = scmp.eq.s32.totalorder %s31, 1
      %p113 = por %p111, %p112
      %p114 = scmp.ne.s32.totalorder %s103, %s104
      %p115 = scmp.eq.s32.totalorder %s31, 0
      %p116 = por %p114, %p115
      %p117 = scmp.ne.s32.totalorder %s103, %s104
      %p118 = scmp.eq.s32.totalorder %s32, 1
      %p119 = por %p117, %p118
      %p121 = scmp.ne.s32.totalorder %s104, %s120
      %p122 = scmp.eq.s32.totalorder %s32, 0
      %p123 = por %p121, %p122
      %s124 = ssub.s32 %s34, %s41
      %p125 = scmp.eq.s32.totalorder %s124, 0
      %s127 = sadd.s32 %s126, 1
      %s128 = scalar_select %p125, %s126, %s127
      %p131 = pneg %p125
      %p132 = scmp.eq.s32.totalorder %s26, 1
      %p133 = por %p131, %p132
      %p134 = scmp.ne.s32.totalorder %s126, %s129
      %p135 = scmp.eq.s32.totalorder %s26, 0
      %p136 = por %p134, %p135
      %p137 = scmp.ne.s32.totalorder %s126, %s129
      %p138 = scmp.eq.s32.totalorder %s31, 1
      %p139 = por %p137, %p138
      %p140 = scmp.ne.s32.totalorder %s129, %s130
      %p141 = scmp.eq.s32.totalorder %s31, 0
      %p142 = por %p140, %p141
      %p143 = scmp.ne.s32.totalorder %s129, %s130
      %p144 = scmp.eq.s32.totalorder %s32, 1
      %p145 = por %p143, %p144
      %p147 = scmp.ne.s32.totalorder %s130, %s146
      %p148 = scmp.eq.s32.totalorder %s32, 0
      %p149 = por %p147, %p148
      %s150 = ssub.s32 %s33, %s45
      %s151 = ssub.s32 %s34, %s41
      %s152 = sor.u32 %s150, %s151
      %p153 = scmp.eq.s32.totalorder %s152, 0
      %s155 = sadd.s32 %s154, 1
      %s156 = scalar_select %p153, %s154, %s155
      %p159 = pneg %p153
      %p160 = scmp.eq.s32.totalorder %s26, 1
      %p161 = por %p159, %p160
      %p162 = scmp.ne.s32.totalorder %s154, %s157
      %p163 = scmp.eq.s32.totalorder %s26, 0
      %p164 = por %p162, %p163
      %p165 = scmp.ne.s32.totalorder %s154, %s157
      %p166 = scmp.eq.s32.totalorder %s31, 1
      %p167 = por %p165, %p166
      %p168 = scmp.ne.s32.totalorder %s157, %s158
      %p169 = scmp.eq.s32.totalorder %s31, 0
      %p170 = por %p168, %p169
      %p171 = scmp.ne.s32.totalorder %s157, %s158
      %p172 = scmp.eq.s32.totalorder %s32, 1
      %p173 = por %p171, %p172
      %p175 = scmp.ne.s32.totalorder %s158, %s174
      %p176 = scmp.eq.s32.totalorder %s32, 0
      %p177 = por %p175, %p176
      %s178 = ssub.s32 %s33, %s45
      %s179 = ssub.s32 %s34, %s41
      %s180 = sor.u32 %s178, %s179
      %p181 = scmp.eq.s32.totalorder %s180, 0
      %s183 = sadd.s32 %s182, 1
      %s184 = scalar_select %p181, %s182, %s183
      %p187 = pneg %p181
      %p188 = scmp.eq.s32.totalorder %s26, 1
      %p189 = por %p187, %p188
      %p190 = scmp.ne.s32.totalorder %s182, %s185
      %p191 = scmp.eq.s32.totalorder %s26, 0
      %p192 = por %p190, %p191
      %p193 = scmp.ne.s32.totalorder %s182, %s185
      %p194 = scmp.eq.s32.totalorder %s31, 1
      %p195 = por %p193, %p194
      %p196 = scmp.ne.s32.totalorder %s185, %s186
      %p197 = scmp.eq.s32.totalorder %s31, 0
      %p198 = por %p196, %p197
      %p199 = scmp.ne.s32.totalorder %s185, %s186
      %p200 = scmp.eq.s32.totalorder %s32, 1
      %p201 = por %p199, %p200
      %p203 = scmp.ne.s32.totalorder %s186, %s202
      %p204 = scmp.eq.s32.totalorder %s32, 0
      %p205 = por %p203, %p204
      %s206 = ssub.s32 %s33, %s45
      %s207 = ssub.s32 %s34, %s41
      %s208 = sor.u32 %s206, %s207
      %p209 = scmp.eq.s32.totalorder %s208, 0
      %s211 = sadd.s32 %s210, 1
      %s212 = scalar_select %p209, %s210, %s211
      %p215 = pneg %p209
      %p216 = scmp.eq.s32.totalorder %s26, 1
      %p217 = por %p215, %p216
      %p218 = scmp.ne.s32.totalorder %s210, %s213
      %p219 = scmp.eq.s32.totalorder %s26, 0
      %p220 = por %p218, %p219
      %p221 = scmp.ne.s32.totalorder %s210, %s213
      %p222 = scmp.eq.s32.totalorder %s31, 1
      %p223 = por %p221, %p222
      %p224 = scmp.ne.s32.totalorder %s213, %s214
      %p225 = scmp.eq.s32.totalorder %s31, 0
      %p226 = por %p224, %p225
      %p227 = scmp.ne.s32.totalorder %s213, %s214
      %p228 = scmp.eq.s32.totalorder %s32, 1
      %p229 = por %p227, %p228
      %p231 = scmp.ne.s32.totalorder %s214, %s230
      %p232 = scmp.eq.s32.totalorder %s32, 0
      %p233 = por %p231, %p232
      %s234 = ssub.s32 %s33, %s45
      %s235 = ssub.s32 %s34, %s41
      %s236 = sor.u32 %s234, %s235
      %p237 = scmp.eq.s32.totalorder %s236, 0
      %s239 = sadd.s32 %s238, 1
      %s240 = scalar_select %p237, %s238, %s239
      %p243 = pneg %p237
      %p244 = scmp.eq.s32.totalorder %s26, 1
      %p245 = por %p243, %p244
      %p246 = scmp.ne.s32.totalorder %s238, %s241
      %p247 = scmp.eq.s32.totalorder %s26, 0
      %p248 = por %p246, %p247
      %p249 = scmp.ne.s32.totalorder %s238, %s241
      %p250 = scmp.eq.s32.totalorder %s31, 1
      %p251 = por %p249, %p250
      %p252 = scmp.ne.s32.totalorder %s241, %s242
      %p253 = scmp.eq.s32.totalorder %s31, 0
      %p254 = por %p252, %p253
      %p255 = scmp.ne.s32.totalorder %s241, %s242
      %p256 = scmp.eq.s32.totalorder %s32, 1
      %p257 = por %p255, %p256
      %p259 = scmp.ne.s32.totalorder %s242, %s258
      %p260 = scmp.eq.s32.totalorder %s32, 0
      %p261 = por %p259, %p260
      %p262 = scmp.le.s32.totalorder 1, %s26
      %p263 = scmp.lt.s32.totalorder %s26, 3
      %p264 = pnand %p262, %p263
      %p265 = pneg %p264
      // Predicated region
      $region9: #{tpu_custom_call.1} parent=5 // pred_check
        _
      $region10: #{tpu_custom_call.1} parent=5 // pred_check_branch
        %267 = sbr.rel (%p264) target = $region12
      $region11: #{tpu_custom_call.1} parent=5 // pred_region
        %s268 = ssub.s32 %s26, 1
        // Predicated region
        $region13: #{tpu_custom_call.1} parent=11 // pred_check
          %p269 = pneg %p64
        $region14: #{tpu_custom_call.1} parent=11 // pred_check_branch
          %271 = sbr.rel (%p269) target = $region16
        $region15: #{tpu_custom_call.1} parent=11 // pred_region
          %p272 = scmp.lt.s32.totalorder %s36, 0
          %s273 = scalar_select %p272, %s36, 0
          %s274 = smul.addr %s273, 8
          %s275 = scalar_lea.vmem %s0, %s274
        $region16: #{tpu_custom_call.1} parent=11 // pred_fallthru
          _
        // Predicated region
        $region17: #{tpu_custom_call.1} parent=11 // pred_check
          %p276 = pneg %p90
        $region18: #{tpu_custom_call.1} parent=11 // pred_check_branch
          %278 = sbr.rel (%p276) target = $region20
        $region19: #{tpu_custom_call.1} parent=11 // pred_region
          %p279 = scmp.lt.s32.totalorder %s36, 0
          %s280 = scalar_select %p279, %s36, 0
          %s281 = smul.addr %s280, 8
          %s282 = scalar_lea.vmem %s1, %s281
        $region20: #{tpu_custom_call.1} parent=11 // pred_fallthru
          _
        // Predicated region
        $region21: #{tpu_custom_call.1} parent=11 // pred_check
          %p283 = pneg %p116
        $region22: #{tpu_custom_call.1} parent=11 // pred_check_branch
          %285 = sbr.rel (%p283) target = $region24
        $region23: #{tpu_custom_call.1} parent=11 // pred_region
          %p286 = scmp.lt.s32.totalorder %s36, 0
          %s287 = scalar_select %p286, %s36, 0
          %s288 = smul.addr %s287, 8
          %s289 = scalar_lea.vmem %s2, %s288
        $region24: #{tpu_custom_call.1} parent=11 // pred_fallthru
          _
        // Predicated region
        $region25: #{tpu_custom_call.1} parent=11 // pred_check
          %p290 = pneg %p142
        $region26: #{tpu_custom_call.1} parent=11 // pred_check_branch
          %292 = sbr.rel (%p290) target = $region28
        $region27: #{tpu_custom_call.1} parent=11 // pred_region
          %p293 = scmp.lt.s32.totalorder %s36, 0
          %s294 = scalar_select %p293, %s36, 0
          %s295 = smul.addr %s294, 8
          %s296 = scalar_lea.vmem %s3, %s295
        $region28: #{tpu_custom_call.1} parent=11 // pred_fallthru
          _
      $region12: #{tpu_custom_call.1} parent=5 // pred_fallthru
        _
      %p297 = scmp.lt.s32.totalorder %s26, 2
      // Predicated region
      $region29: #{tpu_custom_call.1} parent=5 // pred_check
        %p298 = pneg %p297
      $region30: #{tpu_custom_call.1} parent=5 // pred_check_branch
        %300 = sbr.rel (%p298) target = $region32
      $region31: #{tpu_custom_call.1} parent=5 // pred_region
        // Predicated region
        $region33: #{tpu_custom_call.1} parent=31 // pred_check
          %p301 = pneg %p164
        $region34: #{tpu_custom_call.1} parent=31 // pred_check_branch
          %303 = sbr.rel (%p301) target = $region36
        $region35: #{tpu_custom_call.1} parent=31 // pred_region
          %s304 = sand.u32 %s154, 1
          %s305 = scalar_lea.sflag [#allocation3], %s304
          %s306 = sand.u32 %s154, 1
          %s307 = smul.addr %s306, 32
          %s308 = scalar_lea.vmem [#allocation2], %s307
          %s309 = smul.u32 8, %s34
          %s311 = ssub.s32 512, 512
          %312 = vsyncadd %s305, %s311
          %s313 = smul.addr %s33, 8
          %s314 = sadd.s32 %s309, %s313
          %s315 = smul.addr %s314, 64
          %s316 = scalar_lea.hbm %s4, %s315
          %s317 = sshll.u32 %s308, 4
          %s318 = int_to_ptr.vmem [resolvable:$true] %s317
          %323 = dma.hbm_to_vmem [thread:$0]  %s316, 512, %s318, %s305, 64, 64, 4
        $region36: #{tpu_custom_call.1} parent=31 // pred_fallthru
          _
        // Predicated region
        $region37: #{tpu_custom_call.1} parent=31 // pred_check
          %p324 = pneg %p192
        $region38: #{tpu_custom_call.1} parent=31 // pred_check_branch
          %326 = sbr.rel (%p324) target = $region40
        $region39: #{tpu_custom_call.1} parent=31 // pred_region
          %s327 = sand.u32 %s182, 1
          %s328 = scalar_lea.sflag [#allocation6], %s327
          %s329 = sand.u32 %s182, 1
          %s330 = smul.addr %s329, 32
          %s331 = scalar_lea.vmem [#allocation5], %s330
          %s332 = smul.u32 8, %s34
          %s334 = ssub.s32 512, 512
          %335 = vsyncadd %s328, %s334
          %s336 = smul.addr %s33, 8
          %s337 = sadd.s32 %s332, %s336
          %s338 = smul.addr %s337, 64
          %s339 = scalar_lea.hbm %s5, %s338
          %s340 = sshll.u32 %s331, 4
          %s341 = int_to_ptr.vmem [resolvable:$true] %s340
          %346 = dma.hbm_to_vmem [thread:$0]  %s339, 512, %s341, %s328, 64, 64, 4
        $region40: #{tpu_custom_call.1} parent=31 // pred_fallthru
          _
      $region32: #{tpu_custom_call.1} parent=5 // pred_fallthru
        _
      %p347 = scmp.le.s32.totalorder 1, %s26
      %p348 = scmp.lt.s32.totalorder %s26, 3
      %p349 = pnand %p347, %p348
      %p350 = pneg %p349
      // Predicated region
      $region41: #{tpu_custom_call.1} parent=5 // pred_check
        _
      $region42: #{tpu_custom_call.1} parent=5 // pred_check_branch
        %352 = sbr.rel (%p349) target = $region44
      $region43: #{tpu_custom_call.1} parent=5 // pred_region
        %s353 = ssub.s32 %s26, 1
        %s354 = sand.u32 %s157, 1
        %s355 = scalar_lea.sflag [#allocation3], %s354
        %s356 = sand.u32 %s157, 1
        %s357 = smul.addr %s356, 32
        %s358 = scalar_lea.vmem [#allocation2], %s357
        // Predicated region
        $region45: #{tpu_custom_call.1} parent=43 // pred_check
          %p359 = pneg %p170
        $region46: #{tpu_custom_call.1} parent=43 // pred_check_branch
          %361 = sbr.rel (%p359) target = $region48
        $region47: #{tpu_custom_call.1} parent=43 // pred_region
          %362 = dma.done %s355, 512
        $region48: #{tpu_custom_call.1} parent=43 // pred_fallthru
          _
        %s363 = sand.u32 %s185, 1
        %s364 = scalar_lea.sflag [#allocation6], %s363
        %s365 = sand.u32 %s185, 1
        %s366 = smul.addr %s365, 32
        %s367 = scalar_lea.vmem [#allocation5], %s366
        // Predicated region
        $region49: #{tpu_custom_call.1} parent=43 // pred_check
          %p368 = pneg %p198
        $region50: #{tpu_custom_call.1} parent=43 // pred_check_branch
          %370 = sbr.rel (%p368) target = $region52
        $region51: #{tpu_custom_call.1} parent=43 // pred_region
          %371 = dma.done %s364, 512
        $region52: #{tpu_custom_call.1} parent=43 // pred_fallthru
          _
        %p372 = scmp.lt.s32.totalorder %s36, 0
        %s373 = scalar_select %p372, %s36, 0
        %s374 = smul.addr %s373, 8
        %s375 = scalar_lea.vmem %s0, %s374
        %p376 = pneg %p64
        %p377 = pneg %p61
        %p378 = scmp.lt.s32.totalorder %s36, 0
        %s379 = scalar_select %p378, %s36, 0
        %s380 = smul.addr %s379, 8
        %s381 = scalar_lea.vmem %s1, %s380
        %p382 = pneg %p90
        %p383 = pneg %p87
        %p384 = scmp.lt.s32.totalorder %s36, 0
        %s385 = scalar_select %p384, %s36, 0
        %s386 = smul.addr %s385, 8
        %s387 = scalar_lea.vmem %s2, %s386
        %p388 = pneg %p116
        %p389 = pneg %p113
        %p390 = scmp.lt.s32.totalorder %s36, 0
        %s391 = scalar_select %p390, %s36, 0
        %s392 = smul.addr %s391, 8
        %s393 = scalar_lea.vmem %s3, %s392
        %p394 = pneg %p142
        %p395 = pneg %p139
        %s396 = sand.u32 %s157, 1
        %s397 = scalar_lea.sflag [#allocation3], %s396
        %s398 = sand.u32 %s157, 1
        %s399 = smul.addr %s398, 32
        %s400 = scalar_lea.vmem [#allocation2], %s399
        %p401 = pneg %p170
        %p402 = pneg %p167
        %s403 = sand.u32 %s185, 1
        %s404 = scalar_lea.sflag [#allocation6], %s403
        %s405 = sand.u32 %s185, 1
        %s406 = smul.addr %s405, 32
        %s407 = scalar_lea.vmem [#allocation5], %s406
        %p408 = pneg %p198
        %p409 = pneg %p195
        %p410 = pneg %p226
        %p411 = pneg %p223
        %s412 = sand.u32 %s213, 1
        %s413 = scalar_lea.sflag [#allocation4], %s412
        %s414 = sand.u32 %s213, 1
        %s415 = smul.addr %s414, 32
        %s416 = scalar_lea.vmem [#allocation7], %s415
        %p417 = pneg %p254
        %p418 = pneg %p251
        %s419 = sand.u32 %s241, 1
        %s420 = scalar_lea.sflag [#allocation9], %s419
        %s421 = sand.u32 %s241, 1
        %s422 = smul.addr %s421, 32
        %s423 = scalar_lea.vmem [#allocation8], %s422
        %p424 = scmp.lt.s32.totalorder %s36, 0
        %s425 = scalar_select %p424, %s36, 0
        %s426 = smul.addr %s425, 8
        %s427 = scalar_lea.vmem %s0, %s426
        %p428 = scmp.lt.s32.totalorder %s36, 0
        %s429 = scalar_select %p428, %s36, 0
        %s430 = smul.addr %s429, 8
        %s431 = scalar_lea.vmem %s1, %s430
        %p432 = scmp.lt.s32.totalorder %s36, 0
        %s433 = scalar_select %p432, %s36, 0
        %s434 = smul.addr %s433, 8
        %s435 = scalar_lea.vmem %s2, %s434
        %p436 = scmp.lt.s32.totalorder %s36, 0
        %s437 = scalar_select %p436, %s36, 0
        %s438 = smul.addr %s437, 8
        %s439 = scalar_lea.vmem %s3, %s438
        %s440 = smul.u32 8, %s36
        %s441 = smul.u32 8, %s36
        %s442 = smul.u32 8, %s36
        %s443 = smul.u32 8, %s36
        %v444 = vld [vmem:[%s427] sm:$0xff]
        %v446 = vcombine.high %v444, %v444
        %v448 = vunpack.c.l.s4 1966171168
        %v449 = vunpack.c.0.s8 %v448
        %v450 = vlaneseq
        %v451 = vshrl.u32 %v450, 7
        %v452 = vsub.s32 %v449, %v451
        %v453 = vrot.slane %v444, %v452
        %v455 = vunpack.c.l.s4 1966171168
        %v456 = vunpack.c.0.s8 %v455
        %v457 = vlaneseq
        %v458 = vshrl.u32 %v457, 7
        %v459 = vsub.s32 %v456, %v458
        %v460 = vrot.slane %v446, %v459
        %v461 = vcombine.high %v453, %v453
        %v462 = vcombine.high %v460, %v460
        %v464 = vunpack.c.l.s4 1966171168
        %v465 = vunpack.c.0.s8 %v464
        %v466 = vlaneseq
        %v467 = vshrl.u32 %v466, 7
        %v468 = vsub.s32 %v465, %v467
        %v469 = vrot.slane %v453, %v468
        %v471 = vunpack.c.l.s4 1966171168
        %v472 = vunpack.c.0.s8 %v471
        %v473 = vlaneseq
        %v474 = vshrl.u32 %v473, 7
        %v475 = vsub.s32 %v472, %v474
        %v476 = vrot.slane %v460, %v475
        %v478 = vunpack.c.l.s4 1966171168
        %v479 = vunpack.c.0.s8 %v478
        %v480 = vlaneseq
        %v481 = vshrl.u32 %v480, 7
        %v482 = vsub.s32 %v479, %v481
        %v483 = vrot.slane %v461, %v482
        %v485 = vunpack.c.l.s4 1966171168
        %v486 = vunpack.c.0.s8 %v485
        %v487 = vlaneseq
        %v488 = vshrl.u32 %v487, 7
        %v489 = vsub.s32 %v486, %v488
        %v490 = vrot.slane %v462, %v489
        %v491 = vcombine.high %v469, %v469
        %v492 = vcombine.high %v476, %v476
        %v493 = vcombine.high %v483, %v483
        %v494 = vcombine.high %v490, %v490
        %v495 = vld [vmem:[%s431] sm:$0xff]
        %v497 = vcombine.high %v495, %v495
        %v499 = vunpack.c.l.s4 1966171168
        %v500 = vunpack.c.0.s8 %v499
        %v501 = vlaneseq
        %v502 = vshrl.u32 %v501, 7
        %v503 = vsub.s32 %v500, %v502
        %v504 = vrot.slane %v495, %v503
        %v506 = vunpack.c.l.s4 1966171168
        %v507 = vunpack.c.0.s8 %v506
        %v508 = vlaneseq
        %v509 = vshrl.u32 %v508, 7
        %v510 = vsub.s32 %v507, %v509
        %v511 = vrot.slane %v497, %v510
        %v512 = vcombine.high %v504, %v504
        %v513 = vcombine.high %v511, %v511
        %v515 = vunpack.c.l.s4 1966171168
        %v516 = vunpack.c.0.s8 %v515
        %v517 = vlaneseq
        %v518 = vshrl.u32 %v517, 7
        %v519 = vsub.s32 %v516, %v518
        %v520 = vrot.slane %v504, %v519
        %v522 = vunpack.c.l.s4 1966171168
        %v523 = vunpack.c.0.s8 %v522
        %v524 = vlaneseq
        %v525 = vshrl.u32 %v524, 7
        %v526 = vsub.s32 %v523, %v525
        %v527 = vrot.slane %v511, %v526
        %v529 = vunpack.c.l.s4 1966171168
        %v530 = vunpack.c.0.s8 %v529
        %v531 = vlaneseq
        %v532 = vshrl.u32 %v531, 7
        %v533 = vsub.s32 %v530, %v532
        %v534 = vrot.slane %v512, %v533
        %v536 = vunpack.c.l.s4 1966171168
        %v537 = vunpack.c.0.s8 %v536
        %v538 = vlaneseq
        %v539 = vshrl.u32 %v538, 7
        %v540 = vsub.s32 %v537, %v539
        %v541 = vrot.slane %v513, %v540
        %v542 = vcombine.high %v520, %v520
        %v543 = vcombine.high %v527, %v527
        %v544 = vcombine.high %v534, %v534
        %v545 = vcombine.high %v541, %v541
        %v546 = vld [vmem:[%s435] sm:$0xff]
        %v548 = vcombine.high %v546, %v546
        %v550 = vunpack.c.l.s4 1966171168
        %v551 = vunpack.c.0.s8 %v550
        %v552 = vlaneseq
        %v553 = vshrl.u32 %v552, 7
        %v554 = vsub.s32 %v551, %v553
        %v555 = vrot.slane %v546, %v554
        %v557 = vunpack.c.l.s4 1966171168
        %v558 = vunpack.c.0.s8 %v557
        %v559 = vlaneseq
        %v560 = vshrl.u32 %v559, 7
        %v561 = vsub.s32 %v558, %v560
        %v562 = vrot.slane %v548, %v561
        %v563 = vcombine.high %v555, %v555
        %v564 = vcombine.high %v562, %v562
        %v566 = vunpack.c.l.s4 1966171168
        %v567 = vunpack.c.0.s8 %v566
        %v568 = vlaneseq
        %v569 = vshrl.u32 %v568, 7
        %v570 = vsub.s32 %v567, %v569
        %v571 = vrot.slane %v555, %v570
        %v573 = vunpack.c.l.s4 1966171168
        %v574 = vunpack.c.0.s8 %v573
        %v575 = vlaneseq
        %v576 = vshrl.u32 %v575, 7
        %v577 = vsub.s32 %v574, %v576
        %v578 = vrot.slane %v562, %v577
        %v580 = vunpack.c.l.s4 1966171168
        %v581 = vunpack.c.0.s8 %v580
        %v582 = vlaneseq
        %v583 = vshrl.u32 %v582, 7
        %v584 = vsub.s32 %v581, %v583
        %v585 = vrot.slane %v563, %v584
        %v587 = vunpack.c.l.s4 1966171168
        %v588 = vunpack.c.0.s8 %v587
        %v589 = vlaneseq
        %v590 = vshrl.u32 %v589, 7
        %v591 = vsub.s32 %v588, %v590
        %v592 = vrot.slane %v564, %v591
        %v593 = vcombine.high %v571, %v571
        %v594 = vcombine.high %v578, %v578
        %v595 = vcombine.high %v585, %v585
        %v596 = vcombine.high %v592, %v592
        %v597 = vld [vmem:[%s439] sm:$0xff]
        %v599 = vcombine.high %v597, %v597
        %v601 = vunpack.c.l.s4 1966171168
        %v602 = vunpack.c.0.s8 %v601
        %v603 = vlaneseq
        %v604 = vshrl.u32 %v603, 7
        %v605 = vsub.s32 %v602, %v604
        %v606 = vrot.slane %v597, %v605
        %v608 = vunpack.c.l.s4 1966171168
        %v609 = vunpack.c.0.s8 %v608
        %v610 = vlaneseq
        %v611 = vshrl.u32 %v610, 7
        %v612 = vsub.s32 %v609, %v611
        %v613 = vrot.slane %v599, %v612
        %v614 = vcombine.high %v606, %v606
        %v615 = vcombine.high %v613, %v613
        %v617 = vunpack.c.l.s4 1966171168
        %v618 = vunpack.c.0.s8 %v617
        %v619 = vlaneseq
        %v620 = vshrl.u32 %v619, 7
        %v621 = vsub.s32 %v618, %v620
        %v622 = vrot.slane %v606, %v621
        %v624 = vunpack.c.l.s4 1966171168
        %v625 = vunpack.c.0.s8 %v624
        %v626 = vlaneseq
        %v627 = vshrl.u32 %v626, 7
        %v628 = vsub.s32 %v625, %v627
        %v629 = vrot.slane %v613, %v628
        %v631 = vunpack.c.l.s4 1966171168
        %v632 = vunpack.c.0.s8 %v631
        %v633 = vlaneseq
        %v634 = vshrl.u32 %v633, 7
        %v635 = vsub.s32 %v632, %v634
        %v636 = vrot.slane %v614, %v635
        %v638 = vunpack.c.l.s4 1966171168
        %v639 = vunpack.c.0.s8 %v638
        %v640 = vlaneseq
        %v641 = vshrl.u32 %v640, 7
        %v642 = vsub.s32 %v639, %v641
        %v643 = vrot.slane %v615, %v642
        %v644 = vcombine.high %v622, %v622
        %v645 = vcombine.high %v629, %v629
        %v646 = vcombine.high %v636, %v636
        %v647 = vcombine.high %v643, %v643
        %v648 = vld [vmem:[%s358] sm:$0xf]
        %v649 = vld [vmem:[%s358 + $0x4] sm:$0xf]
        %v650 = vld [vmem:[%s358 + $0x8] sm:$0xf]
        %v651 = vld [vmem:[%s358 + $0xc] sm:$0xf]
        %v652 = vld [vmem:[%s358 + $0x10] sm:$0xf]
        %v653 = vld [vmem:[%s358 + $0x14] sm:$0xf]
        %v654 = vld [vmem:[%s358 + $0x18] sm:$0xf]
        %v655 = vld [vmem:[%s358 + $0x1c] sm:$0xf]
        %v656 = vld [vmem:[%s367] sm:$0xf]
        %v657 = vld [vmem:[%s367 + $0x4] sm:$0xf]
        %v658 = vld [vmem:[%s367 + $0x8] sm:$0xf]
        %v659 = vld [vmem:[%s367 + $0xc] sm:$0xf]
        %v660 = vld [vmem:[%s367 + $0x10] sm:$0xf]
        %v661 = vld [vmem:[%s367 + $0x14] sm:$0xf]
        %v662 = vld [vmem:[%s367 + $0x18] sm:$0xf]
        %v663 = vld [vmem:[%s367 + $0x1c] sm:$0xf]
        %664 = vrot.lane.b32.xlu0 %v648, 64
        %v665 = vpop.permute.xlu0 %664
        %666 = vrot.lane.b32.xlu0 %v649, 64
        %v667 = vpop.permute.xlu0 %666
        %668 = vrot.lane.b32.xlu0 %v650, 64
        %v669 = vpop.permute.xlu0 %668
        %670 = vrot.lane.b32.xlu0 %v651, 64
        %v671 = vpop.permute.xlu0 %670
        %672 = vrot.lane.b32.xlu0 %v652, 64
        %v673 = vpop.permute.xlu0 %672
        %674 = vrot.lane.b32.xlu0 %v653, 64
        %v675 = vpop.permute.xlu0 %674
        %676 = vrot.lane.b32.xlu0 %v654, 64
        %v677 = vpop.permute.xlu0 %676
        %678 = vrot.lane.b32.xlu0 %v655, 64
        %v679 = vpop.permute.xlu0 %678
        %680 = vrot.lane.b32.xlu0 %v656, 64
        %v681 = vpop.permute.xlu0 %680
        %682 = vrot.lane.b32.xlu0 %v657, 64
        %v683 = vpop.permute.xlu0 %682
        %684 = vrot.lane.b32.xlu0 %v658, 64
        %v685 = vpop.permute.xlu0 %684
        %686 = vrot.lane.b32.xlu0 %v659, 64
        %v687 = vpop.permute.xlu0 %686
        %688 = vrot.lane.b32.xlu0 %v660, 64
        %v689 = vpop.permute.xlu0 %688
        %690 = vrot.lane.b32.xlu0 %v661, 64
        %v691 = vpop.permute.xlu0 %690
        %692 = vrot.lane.b32.xlu0 %v662, 64
        %v693 = vpop.permute.xlu0 %692
        %694 = vrot.lane.b32.xlu0 %v663, 64
        %v695 = vpop.permute.xlu0 %694
        %v696 = vlaneseq
        %v697 = vshrl.u32 %v696, 7
        %v698 = vsub.s32 0, %v697
        %v699 = vrot.slane %v469, %v698
        %v700 = vlaneseq
        %v701 = vshrl.u32 %v700, 7
        %v702 = vsub.s32 0, %v701
        %v703 = vrot.slane %v483, %v702
        %v704 = vlaneseq
        %v705 = vshrl.u32 %v704, 7
        %v706 = vsub.s32 0, %v705
        %v707 = vrot.slane %v491, %v706
        %v708 = vlaneseq
        %v709 = vshrl.u32 %v708, 7
        %v710 = vsub.s32 0, %v709
        %v711 = vrot.slane %v493, %v710
        %v712 = vlaneseq
        %v713 = vshrl.u32 %v712, 7
        %v714 = vsub.s32 0, %v713
        %v715 = vrot.slane %v476, %v714
        %v716 = vlaneseq
        %v717 = vshrl.u32 %v716, 7
        %v718 = vsub.s32 0, %v717
        %v719 = vrot.slane %v490, %v718
        %v720 = vlaneseq
        %v721 = vshrl.u32 %v720, 7
        %v722 = vsub.s32 0, %v721
        %v723 = vrot.slane %v492, %v722
        %v724 = vlaneseq
        %v725 = vshrl.u32 %v724, 7
        %v726 = vsub.s32 0, %v725
        %v727 = vrot.slane %v494, %v726
        %v736 = vmul.f32 %v648, %v699
        %v737 = vmul.f32 %v649, %v703
        %v738 = vmul.f32 %v650, %v707
        %v739 = vmul.f32 %v651, %v711
        %v740 = vmul.f32 %v652, %v715
        %v741 = vmul.f32 %v653, %v719
        %v742 = vmul.f32 %v654, %v723
        %v743 = vmul.f32 %v655, %v727
        %v744 = vlaneseq
        %v745 = vshrl.u32 %v744, 7
        %v746 = vsub.s32 0, %v745
        %v747 = vrot.slane %v520, %v746
        %v748 = vlaneseq
        %v749 = vshrl.u32 %v748, 7
        %v750 = vsub.s32 0, %v749
        %v751 = vrot.slane %v534, %v750
        %v752 = vlaneseq
        %v753 = vshrl.u32 %v752, 7
        %v754 = vsub.s32 0, %v753
        %v755 = vrot.slane %v542, %v754
        %v756 = vlaneseq
        %v757 = vshrl.u32 %v756, 7
        %v758 = vsub.s32 0, %v757
        %v759 = vrot.slane %v544, %v758
        %v760 = vlaneseq
        %v761 = vshrl.u32 %v760, 7
        %v762 = vsub.s32 0, %v761
        %v763 = vrot.slane %v527, %v762
        %v764 = vlaneseq
        %v765 = vshrl.u32 %v764, 7
        %v766 = vsub.s32 0, %v765
        %v767 = vrot.slane %v541, %v766
        %v768 = vlaneseq
        %v769 = vshrl.u32 %v768, 7
        %v770 = vsub.s32 0, %v769
        %v771 = vrot.slane %v543, %v770
        %v772 = vlaneseq
        %v773 = vshrl.u32 %v772, 7
        %v774 = vsub.s32 0, %v773
        %v775 = vrot.slane %v545, %v774
        %v784 = vmul.f32 %v665, %v747
        %v785 = vmul.f32 %v667, %v751
        %v786 = vmul.f32 %v669, %v755
        %v787 = vmul.f32 %v671, %v759
        %v788 = vmul.f32 %v673, %v763
        %v789 = vmul.f32 %v675, %v767
        %v790 = vmul.f32 %v677, %v771
        %v791 = vmul.f32 %v679, %v775
        %v792 = vadd.f32 %v736, %v784
        %v793 = vadd.f32 %v737, %v785
        %v794 = vadd.f32 %v738, %v786
        %v795 = vadd.f32 %v739, %v787
        %v796 = vadd.f32 %v740, %v788
        %v797 = vadd.f32 %v741, %v789
        %v798 = vadd.f32 %v742, %v790
        %v799 = vadd.f32 %v743, %v791
        %800 = vst [vmem:[%s416] sm:$0xf] %v792
        %801 = vst [vmem:[%s416 + $0x4] sm:$0xf] %v793
        %802 = vst [vmem:[%s416 + $0x8] sm:$0xf] %v794
        %803 = vst [vmem:[%s416 + $0xc] sm:$0xf] %v795
        %804 = vst [vmem:[%s416 + $0x10] sm:$0xf] %v796
        %805 = vst [vmem:[%s416 + $0x14] sm:$0xf] %v797
        %806 = vst [vmem:[%s416 + $0x18] sm:$0xf] %v798
        %807 = vst [vmem:[%s416 + $0x1c] sm:$0xf] %v799
        %v808 = vlaneseq
        %v809 = vshrl.u32 %v808, 7
        %v810 = vsub.s32 0, %v809
        %v811 = vrot.slane %v571, %v810
        %v812 = vlaneseq
        %v813 = vshrl.u32 %v812, 7
        %v814 = vsub.s32 0, %v813
        %v815 = vrot.slane %v585, %v814
        %v816 = vlaneseq
        %v817 = vshrl.u32 %v816, 7
        %v818 = vsub.s32 0, %v817
        %v819 = vrot.slane %v593, %v818
        %v820 = vlaneseq
        %v821 = vshrl.u32 %v820, 7
        %v822 = vsub.s32 0, %v821
        %v823 = vrot.slane %v595, %v822
        %v824 = vlaneseq
        %v825 = vshrl.u32 %v824, 7
        %v826 = vsub.s32 0, %v825
        %v827 = vrot.slane %v578, %v826
        %v828 = vlaneseq
        %v829 = vshrl.u32 %v828, 7
        %v830 = vsub.s32 0, %v829
        %v831 = vrot.slane %v592, %v830
        %v832 = vlaneseq
        %v833 = vshrl.u32 %v832, 7
        %v834 = vsub.s32 0, %v833
        %v835 = vrot.slane %v594, %v834
        %v836 = vlaneseq
        %v837 = vshrl.u32 %v836, 7
        %v838 = vsub.s32 0, %v837
        %v839 = vrot.slane %v596, %v838
        %v848 = vmul.f32 %v656, %v811
        %v849 = vmul.f32 %v657, %v815
        %v850 = vmul.f32 %v658, %v819
        %v851 = vmul.f32 %v659, %v823
        %v852 = vmul.f32 %v660, %v827
        %v853 = vmul.f32 %v661, %v831
        %v854 = vmul.f32 %v662, %v835
        %v855 = vmul.f32 %v663, %v839
        %v856 = vlaneseq
        %v857 = vshrl.u32 %v856, 7
        %v858 = vsub.s32 0, %v857
        %v859 = vrot.slane %v622, %v858
        %v860 = vlaneseq
        %v861 = vshrl.u32 %v860, 7
        %v862 = vsub.s32 0, %v861
        %v863 = vrot.slane %v636, %v862
        %v864 = vlaneseq
        %v865 = vshrl.u32 %v864, 7
        %v866 = vsub.s32 0, %v865
        %v867 = vrot.slane %v644, %v866
        %v868 = vlaneseq
        %v869 = vshrl.u32 %v868, 7
        %v870 = vsub.s32 0, %v869
        %v871 = vrot.slane %v646, %v870
        %v872 = vlaneseq
        %v873 = vshrl.u32 %v872, 7
        %v874 = vsub.s32 0, %v873
        %v875 = vrot.slane %v629, %v874
        %v876 = vlaneseq
        %v877 = vshrl.u32 %v876, 7
        %v878 = vsub.s32 0, %v877
        %v879 = vrot.slane %v643, %v878
        %v880 = vlaneseq
        %v881 = vshrl.u32 %v880, 7
        %v882 = vsub.s32 0, %v881
        %v883 = vrot.slane %v645, %v882
        %v884 = vlaneseq
        %v885 = vshrl.u32 %v884, 7
        %v886 = vsub.s32 0, %v885
        %v887 = vrot.slane %v647, %v886
        %v896 = vmul.f32 %v681, %v859
        %v897 = vmul.f32 %v683, %v863
        %v898 = vmul.f32 %v685, %v867
        %v899 = vmul.f32 %v687, %v871
        %v900 = vmul.f32 %v689, %v875
        %v901 = vmul.f32 %v691, %v879
        %v902 = vmul.f32 %v693, %v883
        %v903 = vmul.f32 %v695, %v887
        %v904 = vadd.f32 %v848, %v896
        %v905 = vadd.f32 %v849, %v897
        %v906 = vadd.f32 %v850, %v898
        %v907 = vadd.f32 %v851, %v899
        %v908 = vadd.f32 %v852, %v900
        %v909 = vadd.f32 %v853, %v901
        %v910 = vadd.f32 %v854, %v902
        %v911 = vadd.f32 %v855, %v903
        %912 = vst [vmem:[%s423] sm:$0xf] %v904
        %913 = vst [vmem:[%s423 + $0x4] sm:$0xf] %v905
        %914 = vst [vmem:[%s423 + $0x8] sm:$0xf] %v906
        %915 = vst [vmem:[%s423 + $0xc] sm:$0xf] %v907
        %916 = vst [vmem:[%s423 + $0x10] sm:$0xf] %v908
        %917 = vst [vmem:[%s423 + $0x14] sm:$0xf] %v909
        %918 = vst [vmem:[%s423 + $0x18] sm:$0xf] %v910
        %919 = vst [vmem:[%s423 + $0x1c] sm:$0xf] %v911
        %s920 = sand.u32 %s213, 1
        %s921 = scalar_lea.sflag [#allocation4], %s920
        %s922 = sand.u32 %s213, 1
        %s923 = smul.addr %s922, 32
        %s924 = scalar_lea.vmem [#allocation7], %s923
        %s925 = sand.u32 %s241, 1
        %s926 = scalar_lea.sflag [#allocation9], %s925
        %s927 = sand.u32 %s241, 1
        %s928 = smul.addr %s927, 32
        %s929 = scalar_lea.vmem [#allocation8], %s928
        // Predicated region
        $region53: #{tpu_custom_call.1} parent=43 // pred_check
          %p930 = pneg %p223
        $region54: #{tpu_custom_call.1} parent=43 // pred_check_branch
          %932 = sbr.rel (%p930) target = $region56
        $region55: #{tpu_custom_call.1} parent=43 // pred_region
          %s933 = smul.u32 8, %s36
          %s935 = ssub.s32 512, 512
          %936 = vsyncadd %s921, %s935
          %s937 = smul.addr %s35, 8
          %s938 = sadd.s32 %s933, %s937
          %s939 = smul.addr %s938, 64
          %s940 = scalar_lea.hbm %s6, %s939
          %s941 = sshll.u32 %s924, 4
          %s942 = int_to_ptr.vmem [resolvable:$true] %s941
          %947 = dma.vmem_to_hbm [thread:$0]  %s942, 512, %s940, %s921, 64, 64, 4
        $region56: #{tpu_custom_call.1} parent=43 // pred_fallthru
          _
        // Predicated region
        $region57: #{tpu_custom_call.1} parent=43 // pred_check
          %p948 = pneg %p251
        $region58: #{tpu_custom_call.1} parent=43 // pred_check_branch
          %950 = sbr.rel (%p948) target = $region60
        $region59: #{tpu_custom_call.1} parent=43 // pred_region
          %s951 = smul.u32 8, %s36
          %s953 = ssub.s32 512, 512
          %954 = vsyncadd %s926, %s953
          %s955 = smul.addr %s35, 8
          %s956 = sadd.s32 %s951, %s955
          %s957 = smul.addr %s956, 64
          %s958 = scalar_lea.hbm %s7, %s957
          %s959 = sshll.u32 %s929, 4
          %s960 = int_to_ptr.vmem [resolvable:$true] %s959
          %965 = dma.vmem_to_hbm [thread:$0]  %s960, 512, %s958, %s926, 64, 64, 4
        $region60: #{tpu_custom_call.1} parent=43 // pred_fallthru
          _
      $region44: #{tpu_custom_call.1} parent=5 // pred_fallthru
        _
      %p966 = scmp.le.s32.totalorder 2, %s26
      // Predicated region
      $region61: #{tpu_custom_call.1} parent=5 // pred_check
        %p967 = pneg %p966
      $region62: #{tpu_custom_call.1} parent=5 // pred_check_branch
        %969 = sbr.rel (%p967) target = $region64
      $region63: #{tpu_custom_call.1} parent=5 // pred_region
        %s970 = ssub.s32 %s26, 2
        // Predicated region
        $region65: #{tpu_custom_call.1} parent=63 // pred_check
          %p971 = pneg %p229
        $region66: #{tpu_custom_call.1} parent=63 // pred_check_branch
          %973 = sbr.rel (%p971) target = $region68
        $region67: #{tpu_custom_call.1} parent=63 // pred_region
          %s974 = sand.u32 %s214, 1
          %s975 = scalar_lea.sflag [#allocation4], %s974
          %s976 = sand.u32 %s214, 1
          %s977 = smul.addr %s976, 32
          %s978 = scalar_lea.vmem [#allocation7], %s977
          %979 = dma.done %s975, 512
        $region68: #{tpu_custom_call.1} parent=63 // pred_fallthru
          _
        // Predicated region
        $region69: #{tpu_custom_call.1} parent=63 // pred_check
          %p980 = pneg %p257
        $region70: #{tpu_custom_call.1} parent=63 // pred_check_branch
          %982 = sbr.rel (%p980) target = $region72
        $region71: #{tpu_custom_call.1} parent=63 // pred_region
          %s983 = sand.u32 %s242, 1
          %s984 = scalar_lea.sflag [#allocation9], %s983
          %s985 = sand.u32 %s242, 1
          %s986 = smul.addr %s985, 32
          %s987 = scalar_lea.vmem [#allocation8], %s986
          %988 = dma.done %s984, 512
        $region72: #{tpu_custom_call.1} parent=63 // pred_fallthru
          _
      $region64: #{tpu_custom_call.1} parent=5 // pred_fallthru
        _
    $region6: #{tpu_custom_call.1} parent=1 // loop_footer
      %s30 = sadd.s32 1, %s26
    $region7: #{tpu_custom_call.1} parent=1 // loop_footer_branch
      %25 = sbr.rel target = $region3
    $region8: #{tpu_custom_call.1} parent=1 // loop_exit
      _
    %989 = vsyncpa [#allocation3], 1
    %s990 = scalar_lea.sflag [#allocation3], 1
    %991 = vsyncpa %s990, 1
    %992 = vsyncpa [#allocation6], 1
    %s993 = scalar_lea.sflag [#allocation6], 1
    %994 = vsyncpa %s993, 1
    %995 = vsyncpa [#allocation4], 1
    %s996 = scalar_lea.sflag [#allocation4], 1
    %997 = vsyncpa %s996, 1
    %998 = vsyncpa [#allocation9], 1
    %s999 = scalar_lea.sflag [#allocation9], 1
    %1000 = vsyncpa %s999, 1

</llo_original>
